<compile_context>
chip_gen: v6e
topology: v6e:2x2x1
jax: 0.10.0
libtpu: 0.0.40
codegen_flags: <defaults>
</compile_context>

<pallas_src>
import functools

import jax
import jax.numpy as jnp
from jax import lax
from jax.experimental import pallas as pl
from jax.experimental.pallas import tpu as pltpu


def _ilapp_loss_kernel(att_ref, ori_ref, guide_ref, out_ref,
                       dot_acc, nsq_acc, *, inv_batch):
    # att_ref/ori_ref/guide_ref : VMEM (B, d_tile)   (any float dtype; cast here)
    # out_ref                   : VMEM (1, 1) float32
    # dot_acc, nsq_acc          : VMEM (B, 1) float32 scratch (persist over grid)
    i = pl.program_id(0)

    @pl.when(i == 0)
    def _init():
        dot_acc[...] = jnp.zeros_like(dot_acc)
        nsq_acc[...] = jnp.zeros_like(nsq_acc)

    att = att_ref[...].astype(jnp.float32)
    ori = ori_ref[...].astype(jnp.float32)
    g = guide_ref[...].astype(jnp.float32)

    diff = att - ori
    # per-row partial dot((att - ori), guide) and partial ||guide||^2
    dot_acc[...] += jnp.sum(diff * g, axis=1, keepdims=True)
    nsq_acc[...] += jnp.sum(g * g, axis=1, keepdims=True)

    @pl.when(i == pl.num_programs(0) - 1)
    def _finalize():
        inv_norm = lax.rsqrt(nsq_acc[...])                  # (B, 1), EUP rsqrt
        per_row = dot_acc[...] * inv_norm                   # (B, 1)
        out_ref[...] = (jnp.sum(per_row, axis=0, keepdims=True)
                        * jnp.float32(inv_batch))           # (1, 1)


def _choose_d_tile(D: int, max_tile: int = 2048) -> int:
    """Largest lane-aligned (multiple of 128) divisor of D that is <= max_tile.

    Falls back to the full width D (always a legal block) when none exists.
    """
    if D <= 512:
        return D
    t = min(max_tile, (D // 2) // 128 * 128)
    while t >= 128:
        if D % t == 0:
            return t
        t -= 128
    return D


def ilapp_loss(att_h_feats, ori_h_feats, guide_feats, *, d_tile=None):
    """Fused ILAPP loss: sum((att - ori) * guide/||guide||) / B  (scalar f32)."""
    B = att_h_feats.shape[0]
    att = att_h_feats.reshape(B, -1)
    ori = ori_h_feats.reshape(B, -1)
    guide = guide_feats.reshape(B, -1)
    D = att.shape[1]
    assert ori.shape == (B, D) and guide.shape == (B, D)

    if d_tile is None:
        d_tile = _choose_d_tile(D)
    if D % d_tile != 0:
        d_tile = D
    grid = (D // d_tile,)

    kernel = functools.partial(_ilapp_loss_kernel, inv_batch=1.0 / B)
    itemsize = jnp.dtype(att.dtype).itemsize

    out = pl.pallas_call(
        kernel,
        out_shape=jax.ShapeDtypeStruct((1, 1), jnp.float32),
        grid_spec=pltpu.PrefetchScalarGridSpec(
            num_scalar_prefetch=0,
            grid=grid,
            in_specs=[
                pl.BlockSpec((B, d_tile), lambda i: (0, i)),   # att
                pl.BlockSpec((B, d_tile), lambda i: (0, i)),   # ori
                pl.BlockSpec((B, d_tile), lambda i: (0, i)),   # guide (raw)
            ],
            out_specs=pl.BlockSpec((1, 1), lambda i: (0, 0)),
            scratch_shapes=[
                pltpu.VMEM((B, 1), jnp.float32),   # dot accumulator
                pltpu.VMEM((B, 1), jnp.float32),   # ||guide||^2 accumulator
            ],
        ),
        compiler_params=pltpu.CompilerParams(
            dimension_semantics=("arbitrary",),    # reduction over D tiles
        ),
        cost_estimate=pl.CostEstimate(
            flops=5 * B * D,
            transcendentals=B,
            bytes_accessed=3 * B * D * itemsize + 4,
        ),
    )(att, ori, guide)
    return out[0, 0]


def make_ilapp_loss(ori_h_feats, guide_feats):
    """Mirror of the PyTorch module: captures ori/guide, returns forward()."""
    B = ori_h_feats.shape[0]
    ori = ori_h_feats.reshape(B, -1)
    guide = guide_feats.reshape(B, -1)
    # NOTE: the per-row L2 normalization done in the PyTorch __init__ is fused
    # into the kernel (dot * rsqrt(||g||^2)) — mathematically identical.

    def forward(att_h_feats):
        return ilapp_loss(att_h_feats, ori, guide)

    return forward


def _ilapp_loss_ref(att, ori, guide):
    """Pure-JAX reference replicating the PyTorch flow exactly."""
    B = att.shape[0]
    att = att.reshape(B, -1).astype(jnp.float32)
    ori = ori.reshape(B, -1).astype(jnp.float32)
    g = guide.reshape(B, -1).astype(jnp.float32)
    gn = g / jnp.linalg.norm(g, axis=1, keepdims=True)
    return jnp.sum((att - ori) * gn) / B


if __name__ == "__main__":
    key = jax.random.PRNGKey(0)
    k1, k2, k3 = jax.random.split(key, 3)

    B, C, H, W = 2, 4, 16, 16          # D = C*H*W = 1024 -> grid of 2 D-tiles
    ori_h_feats = jax.random.normal(k1, (B, C, H, W), dtype=jnp.float32)
    guide_feats = jax.random.normal(k2, (B, C, H, W), dtype=jnp.float32)
    att_h_feats = jax.random.normal(k3, (B, C, H, W), dtype=jnp.float32)

    loss_fn = make_ilapp_loss(ori_h_feats, guide_feats)
    out = jax.block_until_ready(loss_fn(att_h_feats))

    ref = _ilapp_loss_ref(att_h_feats, ori_h_feats, guide_feats)
    assert jnp.allclose(out, ref, atol=1e-4, rtol=1e-4), (out, ref)

    print("KERNEL_OK")
</pallas_src>

<mosaic_0001>
module attributes {stable_mosaic.version = 11 : i64} {
  func.func @_ilapp_loss_kernel(%arg0: i32, %arg1: memref<2x512xf32, #tpu.memory_space<vmem>>, %arg2: memref<2x512xf32, #tpu.memory_space<vmem>>, %arg3: memref<2x512xf32, #tpu.memory_space<vmem>>, %arg4: memref<1x1xf32, #tpu.memory_space<vmem>>, %arg5: memref<2x1xf32, #tpu.memory_space<vmem>>, %arg6: memref<2x1xf32, #tpu.memory_space<vmem>>) attributes {dimension_semantics = [#tpu.dimension_semantics<arbitrary>], iteration_bounds = array<i64: 2>, scalar_prefetch = 0 : i64, scratch_operands = 2 : i64, tpu.core_type = #tpu.core_type<tc>, window_params = [{transform_indices = @transform_0, window_bounds = array<i64: 2, 512>}, {transform_indices = @transform_1, window_bounds = array<i64: 2, 512>}, {transform_indices = @transform_2, window_bounds = array<i64: 2, 512>}, {pipeline_mode = #tpu.pipeline_mode<synchronous>, transform_indices = @transform_3, window_bounds = array<i64: 1, 1>}]} {
    %c0_i32 = arith.constant 0 : i32
    %0 = arith.cmpi eq, %arg0, %c0_i32 : i32
    %1 = arith.extui %0 : i1 to i32
    %c0_i32_0 = arith.constant 0 : i32
    %2 = arith.cmpi ne, %1, %c0_i32_0 : i32
    scf.if %2 {
      %cst_16 = arith.constant 0.000000e+00 : f32
      %22 = vector.broadcast %cst_16 : f32 to vector<2x1xf32>
      %c0_17 = arith.constant 0 : index
      %c0_18 = arith.constant 0 : index
      %23 = vector.load %arg5[%c0_17, %c0_18] : memref<2x1xf32, #tpu.memory_space<vmem>>, vector<2x1xf32>
      tpu.vector_store %arg5[%c0_17, %c0_18], %22 {strides = array<i32>} : memref<2x1xf32, #tpu.memory_space<vmem>>, vector<2x1xf32>,
      %cst_19 = arith.constant 0.000000e+00 : f32
      %24 = vector.broadcast %cst_19 : f32 to vector<2x1xf32>
      %c0_20 = arith.constant 0 : index
      %c0_21 = arith.constant 0 : index
      %25 = vector.load %arg6[%c0_20, %c0_21] : memref<2x1xf32, #tpu.memory_space<vmem>>, vector<2x1xf32>
      tpu.vector_store %arg6[%c0_20, %c0_21], %24 {strides = array<i32>} : memref<2x1xf32, #tpu.memory_space<vmem>>, vector<2x1xf32>,
    } else {
    }
    %c0 = arith.constant 0 : index
    %c0_1 = arith.constant 0 : index
    %3 = vector.load %arg1[%c0, %c0_1] : memref<2x512xf32, #tpu.memory_space<vmem>>, vector<2x512xf32>
    %c0_2 = arith.constant 0 : index
    %c0_3 = arith.constant 0 : index
    %4 = vector.load %arg2[%c0_2, %c0_3] : memref<2x512xf32, #tpu.memory_space<vmem>>, vector<2x512xf32>
    %c0_4 = arith.constant 0 : index
    %c0_5 = arith.constant 0 : index
    %5 = vector.load %arg3[%c0_4, %c0_5] : memref<2x512xf32, #tpu.memory_space<vmem>>, vector<2x512xf32>
    %6 = arith.subf %3, %4 : vector<2x512xf32>
    %c0_6 = arith.constant 0 : index
    %c0_7 = arith.constant 0 : index
    %7 = vector.load %arg5[%c0_6, %c0_7] : memref<2x1xf32, #tpu.memory_space<vmem>>, vector<2x1xf32>
    %8 = arith.mulf %6, %5 : vector<2x512xf32>
    %cst = arith.constant dense<0.000000e+00> : vector<2xf32>
    %9 = vector.multi_reduction <add>, %8, %cst [1] : vector<2x512xf32> to vector<2xf32>
    %10 = vector.shape_cast %9 : vector<2xf32> to vector<2x1xf32>
    %11 = arith.addf %7, %10 : vector<2x1xf32>
    %c0_8 = arith.constant 0 : index
    %c0_9 = arith.constant 0 : index
    %12 = vector.load %arg5[%c0_8, %c0_9] : memref<2x1xf32, #tpu.memory_space<vmem>>, vector<2x1xf32>
    tpu.vector_store %arg5[%c0_8, %c0_9], %11 {strides = array<i32>} : memref<2x1xf32, #tpu.memory_space<vmem>>, vector<2x1xf32>,
    %c0_10 = arith.constant 0 : index
    %c0_11 = arith.constant 0 : index
    %13 = vector.load %arg6[%c0_10, %c0_11] : memref<2x1xf32, #tpu.memory_space<vmem>>, vector<2x1xf32>
    %14 = arith.mulf %5, %5 : vector<2x512xf32>
    %cst_12 = arith.constant dense<0.000000e+00> : vector<2xf32>
    %15 = vector.multi_reduction <add>, %14, %cst_12 [1] : vector<2x512xf32> to vector<2xf32>
    %16 = vector.shape_cast %15 : vector<2xf32> to vector<2x1xf32>
    %17 = arith.addf %13, %16 : vector<2x1xf32>
    %c0_13 = arith.constant 0 : index
    %c0_14 = arith.constant 0 : index
    %18 = vector.load %arg6[%c0_13, %c0_14] : memref<2x1xf32, #tpu.memory_space<vmem>>, vector<2x1xf32>
    tpu.vector_store %arg6[%c0_13, %c0_14], %17 {strides = array<i32>} : memref<2x1xf32, #tpu.memory_space<vmem>>, vector<2x1xf32>,
    %c1_i32 = arith.constant 1 : i32
    %19 = arith.cmpi eq, %arg0, %c1_i32 : i32
    %20 = arith.extui %19 : i1 to i32
    %c0_i32_15 = arith.constant 0 : i32
    %21 = arith.cmpi ne, %20, %c0_i32_15 : i32
    scf.if %21 {
      %c0_16 = arith.constant 0 : index
      %c0_17 = arith.constant 0 : index
      %22 = vector.load %arg6[%c0_16, %c0_17] : memref<2x1xf32, #tpu.memory_space<vmem>>, vector<2x1xf32>
      %23 = math.rsqrt %22 : vector<2x1xf32>
      %c0_18 = arith.constant 0 : index
      %c0_19 = arith.constant 0 : index
      %24 = vector.load %arg5[%c0_18, %c0_19] : memref<2x1xf32, #tpu.memory_space<vmem>>, vector<2x1xf32>
      %25 = arith.mulf %24, %23 : vector<2x1xf32>
      %cst_20 = arith.constant dense<0.000000e+00> : vector<1xf32>
      %26 = vector.multi_reduction <add>, %25, %cst_20 [0] : vector<2x1xf32> to vector<1xf32>
      %27 = vector.shape_cast %26 : vector<1xf32> to vector<1x1xf32>
      %cst_21 = arith.constant 5.000000e-01 : f32
      %28 = vector.broadcast %cst_21 : f32 to vector<1x1xf32>
      %29 = arith.mulf %27, %28 : vector<1x1xf32>
      %c0_22 = arith.constant 0 : index
      %c0_23 = arith.constant 0 : index
      %30 = vector.load %arg4[%c0_22, %c0_23] : memref<1x1xf32, #tpu.memory_space<vmem>>, vector<1x1xf32>
      tpu.vector_store %arg4[%c0_22, %c0_23], %29 {strides = array<i32>} : memref<1x1xf32, #tpu.memory_space<vmem>>, vector<1x1xf32>,
    } else {
    }
    return
  }
  func.func @transform_0(%arg0: i32) -> (i32, i32) {
    %c0_i32 = arith.constant 0 : i32
    %c0_i32_0 = arith.constant 0 : i32
    return %c0_i32, %arg0 : i32, i32
  }
  func.func @transform_1(%arg0: i32) -> (i32, i32) {
    %c0_i32 = arith.constant 0 : i32
    %c0_i32_0 = arith.constant 0 : i32
    return %c0_i32, %arg0 : i32, i32
  }
  func.func @transform_2(%arg0: i32) -> (i32, i32) {
    %c0_i32 = arith.constant 0 : i32
    %c0_i32_0 = arith.constant 0 : i32
    return %c0_i32, %arg0 : i32, i32
  }
  func.func @transform_3(%arg0: i32) -> (i32, i32) {
    %c0_i32 = arith.constant 0 : i32
    %c0_i32_0 = arith.constant 0 : i32
    %c0_i32_1 = arith.constant 0 : i32
    return %c0_i32, %c0_i32_0 : i32, i32
  }
}

</mosaic_0001>

<llo_original>
// kernel: tpu_custom_call.1
$region0: #{tpu_custom_call.1}
  #allocation0 [shape = 'u32[]', space=smem, size = 0x4, offset = 0x4, fixed_abs, tag = 'smem constant byte address 0x4 - core index']
  #allocation1 [shape = 'u32[144,128]{1,0:T(1,128)}', space=vmem, size = 0x12000, scoped, tag = 'internal scratch']
  #allocation2 [shape = 'f32[2,1]{1,0:T(2,128)}', space=vmem, size = 0x400, scoped, tag = 'scratch operand']
  #allocation3 [shape = 'f32[2,1]{1,0:T(2,128)}', space=vmem, size = 0x400, scoped, tag = 'scratch operand']
  %s0 = inlined_call_operand.hbm [shape: f32[2,1024], index: 0, kind: input, shape index: {}]
  %s1 = inlined_call_operand.hbm [shape: f32[2,1024], index: 1, kind: input, shape index: {}]
  %s2 = inlined_call_operand.hbm [shape: f32[2,1024], index: 2, kind: input, shape index: {}]
  %s3 = inlined_call_operand.hbm [shape: f32[1,1], index: 3, kind: output, shape index: {}]
  %s4 = sld [smem:[#allocation0]]
  $region65: #{tpu_custom_call.1} parent=0
    _
  %s6 = ssub.s32 1, %s4
  %s7 = scalar_select 0, %s6, %s4
  $region1: #{tpu_custom_call.1} parent=0
    #allocation4 [shape = 'u8[8192]{0}', space=vmem, size = 0x2000, scoped, tag = 'input window, operand 0']
    #allocation5 [shape = 's32[2]{0}', space=sflag, size = 0x8, scoped, tag = 'scoped memory for tpu_custom_call.1']
    #allocation6 [shape = 's32[2]{0}', space=sflag, size = 0x8, scoped, tag = 'scoped memory for tpu_custom_call.1']
    #allocation7 [shape = 'u8[8192]{0}', space=vmem, size = 0x2000, scoped, tag = 'input window, operand 1']
    #allocation8 [shape = 's32[2]{0}', space=sflag, size = 0x8, scoped, tag = 'scoped memory for tpu_custom_call.1']
    #allocation9 [shape = 'u8[8192]{0}', space=vmem, size = 0x2000, scoped, tag = 'input window, operand 2']
    #allocation10 [shape = 'u8[512]{0}', space=vmem, size = 0x400, scoped, tag = 'output window, operand 0, single buffered']
    %8 = vsyncpa [#allocation5], 0
    %s9 = scalar_lea.sflag [#allocation5], 1
    %10 = vsyncpa %s9, 0
    %11 = vsyncpa [#allocation8], 0
    %s12 = scalar_lea.sflag [#allocation8], 1
    %13 = vsyncpa %s12, 0
    %14 = vsyncpa [#allocation6], 0
    loop: start=0, step=1, limit=4
    $region2: #{tpu_custom_call.1} parent=1 // loop_pre_header
      _
    $region3: #{tpu_custom_call.1} parent=1 // loop_header
      %s16 = sphi 0, %s20
      %p17 = scmp.ge.s32.totalorder %s16, 4
      %s26 = sphi 0, %s28
      %s29 = sphi 0, %s26
      %s30 = sphi 0, %s29
      %s46 = sphi 0, %s30
      %s52 = sphi 0, %s54
      %s55 = sphi 0, %s52
      %s56 = sphi 0, %s55
      %s72 = sphi 0, %s56
      %s78 = sphi 0, %s80
      %s81 = sphi 0, %s78
      %s82 = sphi 0, %s81
      %s98 = sphi 0, %s82
      %s102 = sphi 0, %s102
      %s104 = sphi 0, %s102
      %s105 = sphi 0, %s104
      %s119 = sphi 0, %s105
    $region4: #{tpu_custom_call.1} parent=1 // loop_header_branch
      %19 = sbr.rel (%p17) target = $region8
    $region5: #{tpu_custom_call.1} parent=1 // loop_body
      %s21 = ssub.s32 %s16, 1
      %s22 = ssub.s32 %s16, 2
      %s23 = sadd.s32 %s16, 1
      %s24 = ssub.s32 %s16, %s23
      %p25 = scmp.eq.s32.totalorder %s24, 0
      %s27 = sadd.s32 %s26, 1
      %s28 = scalar_select %p25, %s26, %s27
      %p31 = pneg %p25
      %p32 = scmp.eq.s32.totalorder %s16, 1
      %p33 = por %p31, %p32
      %p34 = scmp.ne.s32.totalorder %s26, %s29
      %p35 = scmp.eq.s32.totalorder %s16, 0
      %p36 = por %p34, %p35
      %p37 = scmp.ne.s32.totalorder %s26, %s29
      %p38 = scmp.eq.s32.totalorder %s21, 1
      %p39 = por %p37, %p38
      %p40 = scmp.ne.s32.totalorder %s29, %s30
      %p41 = scmp.eq.s32.totalorder %s21, 0
      %p42 = por %p40, %p41
      %p43 = scmp.ne.s32.totalorder %s29, %s30
      %p44 = scmp.eq.s32.totalorder %s22, 1
      %p45 = por %p43, %p44
      %p47 = scmp.ne.s32.totalorder %s30, %s46
      %p48 = scmp.eq.s32.totalorder %s22, 0
      %p49 = por %p47, %p48
      %s50 = ssub.s32 %s16, %s23
      %p51 = scmp.eq.s32.totalorder %s50, 0
      %s53 = sadd.s32 %s52, 1
      %s54 = scalar_select %p51, %s52, %s53
      %p57 = pneg %p51
      %p58 = scmp.eq.s32.totalorder %s16, 1
      %p59 = por %p57, %p58
      %p60 = scmp.ne.s32.totalorder %s52, %s55
      %p61 = scmp.eq.s32.totalorder %s16, 0
      %p62 = por %p60, %p61
      %p63 = scmp.ne.s32.totalorder %s52, %s55
      %p64 = scmp.eq.s32.totalorder %s21, 1
      %p65 = por %p63, %p64
      %p66 = scmp.ne.s32.totalorder %s55, %s56
      %p67 = scmp.eq.s32.totalorder %s21, 0
      %p68 = por %p66, %p67
      %p69 = scmp.ne.s32.totalorder %s55, %s56
      %p70 = scmp.eq.s32.totalorder %s22, 1
      %p71 = por %p69, %p70
      %p73 = scmp.ne.s32.totalorder %s56, %s72
      %p74 = scmp.eq.s32.totalorder %s22, 0
      %p75 = por %p73, %p74
      %s76 = ssub.s32 %s16, %s23
      %p77 = scmp.eq.s32.totalorder %s76, 0
      %s79 = sadd.s32 %s78, 1
      %s80 = scalar_select %p77, %s78, %s79
      %p83 = pneg %p77
      %p84 = scmp.eq.s32.totalorder %s16, 1
      %p85 = por %p83, %p84
      %p86 = scmp.ne.s32.totalorder %s78, %s81
      %p87 = scmp.eq.s32.totalorder %s16, 0
      %p88 = por %p86, %p87
      %p89 = scmp.ne.s32.totalorder %s78, %s81
      %p90 = scmp.eq.s32.totalorder %s21, 1
      %p91 = por %p89, %p90
      %p92 = scmp.ne.s32.totalorder %s81, %s82
      %p93 = scmp.eq.s32.totalorder %s21, 0
      %p94 = por %p92, %p93
      %p95 = scmp.ne.s32.totalorder %s81, %s82
      %p96 = scmp.eq.s32.totalorder %s22, 1
      %p97 = por %p95, %p96
      %p99 = scmp.ne.s32.totalorder %s82, %s98
      %p100 = scmp.eq.s32.totalorder %s22, 0
      %p101 = por %p99, %p100
      %s103 = sadd.s32 %s102, 1
      %p106 = scmp.eq.s32.totalorder %s16, 1
      %p107 = scmp.ne.s32.totalorder %s102, %s104
      %p108 = scmp.eq.s32.totalorder %s16, 0
      %p109 = por %p107, %p108
      %p110 = scmp.ne.s32.totalorder %s102, %s104
      %p111 = scmp.eq.s32.totalorder %s21, 1
      %p112 = por %p110, %p111
      %p113 = scmp.ne.s32.totalorder %s104, %s105
      %p114 = scmp.eq.s32.totalorder %s21, 0
      %p115 = por %p113, %p114
      %p116 = scmp.ne.s32.totalorder %s104, %s105
      %p117 = scmp.eq.s32.totalorder %s22, 1
      %p118 = por %p116, %p117
      %p120 = scmp.ne.s32.totalorder %s105, %s119
      %p121 = scmp.eq.s32.totalorder %s22, 0
      %p122 = por %p120, %p121
      %p123 = scmp.le.s32.totalorder 1, %s16
      %p124 = scmp.lt.s32.totalorder %s16, 3
      %p125 = pnand %p123, %p124
      %p126 = pneg %p125
      // Predicated region
      $region9: #{tpu_custom_call.1} parent=5 // pred_check
        _
      $region10: #{tpu_custom_call.1} parent=5 // pred_check_branch
        %128 = sbr.rel (%p125) target = $region12
      $region11: #{tpu_custom_call.1} parent=5 // pred_region
        %s129 = ssub.s32 %s16, 1
      $region12: #{tpu_custom_call.1} parent=5 // pred_fallthru
        _
      %p130 = scmp.lt.s32.totalorder %s16, 2
      // Predicated region
      $region13: #{tpu_custom_call.1} parent=5 // pred_check
        %p131 = pneg %p130
      $region14: #{tpu_custom_call.1} parent=5 // pred_check_branch
        %133 = sbr.rel (%p131) target = $region16
      $region15: #{tpu_custom_call.1} parent=5 // pred_region
        // Predicated region
        $region17: #{tpu_custom_call.1} parent=15 // pred_check
          %p134 = pneg %p36
        $region18: #{tpu_custom_call.1} parent=15 // pred_check_branch
          %136 = sbr.rel (%p134) target = $region20
        $region19: #{tpu_custom_call.1} parent=15 // pred_region
          %s137 = sand.u32 %s26, 1
          %s138 = scalar_lea.sflag [#allocation5], %s137
          %s139 = sand.u32 %s26, 1
          %s140 = smul.addr %s139, 8
          %s141 = scalar_lea.vmem [#allocation4], %s140
          %s142 = smul.u32 4, %s16
          %s144 = ssub.s32 128, 128
          %145 = vsyncadd %s138, %s144
          %s146 = smul.addr %s142, 32
          %s147 = scalar_lea.hbm %s0, %s146
          %s149 = sshll.u32 %s141, 4
          %s150 = int_to_ptr.vmem [resolvable:$true] %s149
          %152 = dma.hbm_to_vmem [thread:$0]  %s147, 128, %s150, %s138
        $region20: #{tpu_custom_call.1} parent=15 // pred_fallthru
          _
        // Predicated region
        $region21: #{tpu_custom_call.1} parent=15 // pred_check
          %p153 = pneg %p62
        $region22: #{tpu_custom_call.1} parent=15 // pred_check_branch
          %155 = sbr.rel (%p153) target = $region24
        $region23: #{tpu_custom_call.1} parent=15 // pred_region
          %s156 = sand.u32 %s16, 1
          %s157 = scalar_lea.sflag [#allocation8], %s156
          %s158 = sand.u32 %s52, 1
          %s159 = smul.addr %s158, 8
          %s160 = scalar_lea.vmem [#allocation7], %s159
          %s161 = smul.u32 4, %s16
          %s163 = ssub.s32 128, 128
          %164 = vsyncadd %s157, %s163
          %s165 = smul.addr %s161, 32
          %s166 = scalar_lea.hbm %s1, %s165
          %s168 = sshll.u32 %s160, 4
          %s169 = int_to_ptr.vmem [resolvable:$true] %s168
          %171 = dma.hbm_to_vmem [thread:$0]  %s166, 128, %s169, %s157
        $region24: #{tpu_custom_call.1} parent=15 // pred_fallthru
          _
        // Predicated region
        $region25: #{tpu_custom_call.1} parent=15 // pred_check
          %p172 = pneg %p88
        $region26: #{tpu_custom_call.1} parent=15 // pred_check_branch
          %174 = sbr.rel (%p172) target = $region28
        $region27: #{tpu_custom_call.1} parent=15 // pred_region
          %s175 = sand.u32 %s16, 1
          %s176 = scalar_lea.sflag [#allocation8], %s175
          %s177 = sand.u32 %s78, 1
          %s178 = smul.addr %s177, 8
          %s179 = scalar_lea.vmem [#allocation9], %s178
          %s180 = smul.u32 4, %s16
          %s182 = ssub.s32 128, 128
          %183 = vsyncadd %s176, %s182
          %s184 = smul.addr %s180, 32
          %s185 = scalar_lea.hbm %s2, %s184
          %s187 = sshll.u32 %s179, 4
          %s188 = int_to_ptr.vmem [resolvable:$true] %s187
          %190 = dma.hbm_to_vmem [thread:$0]  %s185, 128, %s188, %s176
        $region28: #{tpu_custom_call.1} parent=15 // pred_fallthru
          _
      $region16: #{tpu_custom_call.1} parent=5 // pred_fallthru
        _
      %p191 = scmp.le.s32.totalorder 1, %s16
      %p192 = scmp.lt.s32.totalorder %s16, 3
      %p193 = pnand %p191, %p192
      %p194 = pneg %p193
      // Predicated region
      $region29: #{tpu_custom_call.1} parent=5 // pred_check
        _
      $region30: #{tpu_custom_call.1} parent=5 // pred_check_branch
        %196 = sbr.rel (%p193) target = $region32
      $region31: #{tpu_custom_call.1} parent=5 // pred_region
        %s197 = ssub.s32 %s16, 1
        %s198 = sand.u32 %s29, 1
        %s199 = scalar_lea.sflag [#allocation5], %s198
        %s200 = sand.u32 %s29, 1
        %s201 = smul.addr %s200, 8
        %s202 = scalar_lea.vmem [#allocation4], %s201
        // Predicated region
        $region33: #{tpu_custom_call.1} parent=31 // pred_check
          %p203 = pneg %p42
        $region34: #{tpu_custom_call.1} parent=31 // pred_check_branch
          %205 = sbr.rel (%p203) target = $region36
        $region35: #{tpu_custom_call.1} parent=31 // pred_region
          %206 = dma.done %s199, 128
        $region36: #{tpu_custom_call.1} parent=31 // pred_fallthru
          _
        %s207 = sand.u32 %s21, 1
        %s208 = scalar_lea.sflag [#allocation8], %s207
        %s209 = sand.u32 %s55, 1
        %s210 = smul.addr %s209, 8
        %s211 = scalar_lea.vmem [#allocation7], %s210
        // Predicated region
        $region37: #{tpu_custom_call.1} parent=31 // pred_check
          %p212 = pneg %p68
        $region38: #{tpu_custom_call.1} parent=31 // pred_check_branch
          %214 = sbr.rel (%p212) target = $region40
        $region39: #{tpu_custom_call.1} parent=31 // pred_region
          %215 = dma.done %s208, 128
        $region40: #{tpu_custom_call.1} parent=31 // pred_fallthru
          _
        %s216 = sand.u32 %s21, 1
        %s217 = scalar_lea.sflag [#allocation8], %s216
        %s218 = sand.u32 %s81, 1
        %s219 = smul.addr %s218, 8
        %s220 = scalar_lea.vmem [#allocation9], %s219
        // Predicated region
        $region41: #{tpu_custom_call.1} parent=31 // pred_check
          %p221 = pneg %p94
        $region42: #{tpu_custom_call.1} parent=31 // pred_check_branch
          %223 = sbr.rel (%p221) target = $region44
        $region43: #{tpu_custom_call.1} parent=31 // pred_region
          %224 = dma.done %s217, 128
        $region44: #{tpu_custom_call.1} parent=31 // pred_fallthru
          _
        %s225 = sand.u32 %s29, 1
        %s226 = scalar_lea.sflag [#allocation5], %s225
        %s227 = sand.u32 %s29, 1
        %s228 = smul.addr %s227, 8
        %s229 = scalar_lea.vmem [#allocation4], %s228
        %p230 = pneg %p42
        %p231 = pneg %p39
        %s232 = sand.u32 %s21, 1
        %s233 = scalar_lea.sflag [#allocation8], %s232
        %s234 = sand.u32 %s55, 1
        %s235 = smul.addr %s234, 8
        %s236 = scalar_lea.vmem [#allocation7], %s235
        %p237 = pneg %p68
        %p238 = pneg %p65
        %s239 = sand.u32 %s21, 1
        %s240 = scalar_lea.sflag [#allocation8], %s239
        %s241 = sand.u32 %s81, 1
        %s242 = smul.addr %s241, 8
        %s243 = scalar_lea.vmem [#allocation9], %s242
        %p244 = pneg %p94
        %p245 = pneg %p91
        %p246 = pneg %p115
        %p247 = pneg %p112
        %s248 = smul.u32 4, %s21
        %s249 = smul.u32 4, %s21
        %s250 = smul.u32 4, %s21
        %p251 = scmp.eq.s32.totalorder %s21, 0
        // Predicated region
        $region45: #{tpu_custom_call.1} parent=31 // pred_check
          %p252 = pneg %p251
        $region46: #{tpu_custom_call.1} parent=31 // pred_check_branch
          %254 = sbr.rel (%p252) target = $region48
        $region47: #{tpu_custom_call.1} parent=31 // pred_region
          %vm255 = vcmask 1024
          %256 = vst.msk [vmem:[#allocation2] sm:$0x3] %vm255, 0.0
          %257 = vst.msk [vmem:[#allocation3] sm:$0x3] %vm255, 0.0
        $region48: #{tpu_custom_call.1} parent=31 // pred_fallthru
          _
        %v258 = vld [vmem:[%s202] sm:$0xff]
        %v259 = vld [vmem:[%s211] sm:$0xff]
        %v260 = vld [vmem:[%s220] sm:$0xff]
        %v261 = vsub.f32 %v258, %v259
        %v262 = vld [vmem:[#allocation2] sm:$0x3]
        %v263 = vmul.f32 %v261, %v260
        %v265 = vcombine.high %v263, %v263
        %v267 = vunpack.c.l.s4 1983009808
        %v268 = vunpack.c.0.s8 %v267
        %v269 = vlaneseq
        %v270 = vshrl.u32 %v269, 7
        %v271 = vsub.s32 %v268, %v270
        %v272 = vrot.slane %v263, %v271
        %v274 = vunpack.c.l.s4 1983009808
        %v275 = vunpack.c.0.s8 %v274
        %v276 = vlaneseq
        %v277 = vshrl.u32 %v276, 7
        %v278 = vsub.s32 %v275, %v277
        %v279 = vrot.slane %v265, %v278
        %v280 = vcombine.high %v272, %v272
        %v281 = vcombine.high %v279, %v279
        %vm286 = vcmask 1041408
        %v287 = vsel %vm286, %v272, 0.0
        %v288 = vsel %vm286, %v280, 0.0
        %v289 = vadd.f32 %v287, %v288
        %v290 = vsel %vm286, %v279, 0.0
        %v291 = vadd.f32 %v289, %v290
        %v292 = vsel %vm286, %v281, 0.0
        %v293 = vadd.f32 %v291, %v292
        %294 = vadd.xlane.f32.xlu0 %v293
        %v295 = vpop.xlane.xlu0 %294
        %v296 = vadd.f32 %v262, %v295
        %vm297 = vcmask 1024
        %298 = vst.msk [vmem:[#allocation2] sm:$0x3] %vm297, %v296
        %v299 = vld [vmem:[#allocation3] sm:$0x3]
        %v300 = vmul.f32 %v260, %v260
        %v302 = vcombine.high %v300, %v300
        %v304 = vunpack.c.l.s4 1983009808
        %v305 = vunpack.c.0.s8 %v304
        %v306 = vlaneseq
        %v307 = vshrl.u32 %v306, 7
        %v308 = vsub.s32 %v305, %v307
        %v309 = vrot.slane %v300, %v308
        %v311 = vunpack.c.l.s4 1983009808
        %v312 = vunpack.c.0.s8 %v311
        %v313 = vlaneseq
        %v314 = vshrl.u32 %v313, 7
        %v315 = vsub.s32 %v312, %v314
        %v316 = vrot.slane %v302, %v315
        %v317 = vcombine.high %v309, %v309
        %v318 = vcombine.high %v316, %v316
        %v323 = vsel %vm286, %v309, 0.0
        %v324 = vsel %vm286, %v317, 0.0
        %v325 = vadd.f32 %v323, %v324
        %v326 = vsel %vm286, %v316, 0.0
        %v327 = vadd.f32 %v325, %v326
        %v328 = vsel %vm286, %v318, 0.0
        %v329 = vadd.f32 %v327, %v328
        %330 = vadd.xlane.f32.xlu0 %v329
        %v331 = vpop.xlane.xlu0 %330
        %v332 = vadd.f32 %v299, %v331
        %333 = vst.msk [vmem:[#allocation3] sm:$0x3] %vm297, %v332
        %p334 = scmp.eq.s32.totalorder %s21, 1
        // Predicated region
        $region49: #{tpu_custom_call.1} parent=31 // pred_check
          %p335 = pneg %p334
        $region50: #{tpu_custom_call.1} parent=31 // pred_check_branch
          %337 = sbr.rel (%p335) target = $region52
        $region51: #{tpu_custom_call.1} parent=31 // pred_region
          %v338 = vld [vmem:[#allocation3] sm:$0x3]
          %v339 = vrsqrt.pop %v338
          %v340 = vld [vmem:[#allocation2] sm:$0x3]
          %v341 = vmul.f32 %v340, %v339
          %v342 = vsel %vm297, %v341, 0.0
          %v343 = vrot.slane %v342, 4
          %v344 = vadd.f32 %v342, %v343
          %v345 = vrot.slane %v344, 2
          %v346 = vadd.f32 %v344, %v345
          %v347 = vrot.slane %v346, 1
          %v348 = vadd.f32 %v346, %v347
          %v349 = vmul.f32 %v348, 0.5
          %vm350 = vcmask 0
          %351 = vst.msk [vmem:[#allocation10] sm:$0x1] %vm350, %v349
        $region52: #{tpu_custom_call.1} parent=31 // pred_fallthru
          _
        // Predicated region
        $region53: #{tpu_custom_call.1} parent=31 // pred_check
          %p352 = pneg %p112
        $region54: #{tpu_custom_call.1} parent=31 // pred_check_branch
          %354 = sbr.rel (%p352) target = $region56
        $region55: #{tpu_custom_call.1} parent=31 // pred_region
          %s356 = ssub.s32 16, 16
          %357 = vsyncadd [#allocation6], %s356
          %s359 = sshll.u32 [#allocation10], 4
          %s360 = int_to_ptr.vmem [resolvable:$true] %s359
          %362 = dma.vmem_to_hbm [thread:$0]  %s360, 16, %s3, [#allocation6]
        $region56: #{tpu_custom_call.1} parent=31 // pred_fallthru
          _
        // Predicated region
        $region57: #{tpu_custom_call.1} parent=31 // pred_check
          %p363 = pneg %p112
        $region58: #{tpu_custom_call.1} parent=31 // pred_check_branch
          %365 = sbr.rel (%p363) target = $region60
        $region59: #{tpu_custom_call.1} parent=31 // pred_region
          %366 = dma.done [#allocation6], 16
        $region60: #{tpu_custom_call.1} parent=31 // pred_fallthru
          _
      $region32: #{tpu_custom_call.1} parent=5 // pred_fallthru
        _
      %p367 = scmp.le.s32.totalorder 2, %s16
      // Predicated region
      $region61: #{tpu_custom_call.1} parent=5 // pred_check
        %p368 = pneg %p367
      $region62: #{tpu_custom_call.1} parent=5 // pred_check_branch
        %370 = sbr.rel (%p368) target = $region64
      $region63: #{tpu_custom_call.1} parent=5 // pred_region
        %s371 = ssub.s32 %s16, 2
      $region64: #{tpu_custom_call.1} parent=5 // pred_fallthru
        _
    $region6: #{tpu_custom_call.1} parent=1 // loop_footer
      %s20 = sadd.s32 1, %s16
    $region7: #{tpu_custom_call.1} parent=1 // loop_footer_branch
      %15 = sbr.rel target = $region3
    $region8: #{tpu_custom_call.1} parent=1 // loop_exit
      _
    %372 = vsyncpa [#allocation5], 1
    %s373 = scalar_lea.sflag [#allocation5], 1
    %374 = vsyncpa %s373, 1
    %375 = vsyncpa [#allocation8], 1
    %s376 = scalar_lea.sflag [#allocation8], 1
    %377 = vsyncpa %s376, 1
    %378 = vsyncpa [#allocation6], 1
    %s379 = scalar_lea.sflag [#allocation6], 1
    %380 = vsyncpa %s379, 1

</llo_original>
